<compile_context>
chip_gen: v7x
topology: tpu7x:2x2x1
jax: 0.10.0
libtpu: 0.0.40
codegen_flags: <defaults>
</compile_context>

<pallas_src>
import jax
import jax.numpy as jnp
from jax.experimental import pallas as pl
from jax.experimental.pallas import tpu as pltpu

LANES = 128   # lane width: hidden dim padded to this; batch tile is k*LANES


def _round_up(n, m):
    return pl.cdiv(n, m) * m


def qvalue_kernel(xa_ref, w1_ref, b1_ref, w2_ref, b2_ref, w3_ref, b3_ref, out_ref):
    """One batch tile.  Activations are feature-major: batch is the lane axis,
    so the Q output is produced lane-dense with no relayout before the store."""
    xa = xa_ref[...].astype(w1_ref.dtype)                           # (F, TB)

    # fc1: relu(W1 @ [x;a]^T + b1), f32 accumulation on the MXU.
    h1 = jnp.dot(w1_ref[...], xa, preferred_element_type=jnp.float32)
    h1 = jnp.maximum(h1 + b1_ref[...], 0.0)                         # (H, TB) f32

    # fc2: relu(W2 @ h1 + b2).
    h2 = jnp.dot(w2_ref[...], h1.astype(w2_ref.dtype),
                 preferred_element_type=jnp.float32)
    h2 = jnp.maximum(h2 + b2_ref[...], 0.0)                         # (H, TB) f32

    # fc_out: f32 matmul against the (8, H) head block (rows 1..7 are zero),
    # take row 0 -> lane-dense (1, TB) row of Q values.  b3 is an SMEM scalar.
    q = jnp.dot(w3_ref[...], h2, preferred_element_type=jnp.float32)
    out_ref[...] = q[0:1, :] + b3_ref[0, 0]


def qvalue_forward(x, a, kparams, *, tile_b=1024):
    """x: (B, state_dim), a: (B, action_dim), kparams from prepare_params().
    Returns (B, 1) float32 Q-values."""
    w1t, b1c, w2t, b2c, w3r, b3 = kparams
    B = x.shape[0]
    H, F = w1t.shape
    assert x.shape[1] + a.shape[1] == F

    # Feature-major input: one concatenated (F, B) slab so fc1 is one matmul
    # and the batch lives on the lane axis (lane-dense output for free).
    xa_t = jnp.concatenate([x.T, a.T], axis=0)

    # Batch tiling.  Lane-packed batch => tile must be a multiple of 128.
    # Keep >= 2 grid steps when the batch allows so ("parallel",) can shard
    # the grid across v7x's two TensorCores (no-op on single-TC v5e/v6e).
    n_blk = pl.cdiv(B, LANES)                      # number of 128-batch blocks
    blk = min(max(1, tile_b // LANES), n_blk)
    if n_blk >= 2:
        blk = min(blk, max(1, n_blk // 2))
    TB = blk * LANES
    steps = pl.cdiv(n_blk, blk)
    B_pad = steps * TB
    if B_pad != B:
        xa_t = jnp.pad(xa_t, ((0, 0), (0, B_pad - B)))

    # Weights/biases stay VMEM-resident across the grid (constant index_map);
    # single-buffer them — double buffering buys nothing for constant blocks
    # and doubles their VMEM footprint (matters most on v7x's 64 MiB).
    resident = lambda arr: pl.BlockSpec(arr.shape, lambda i: (0, 0),
                                        pipeline_mode=pl.Buffered(1))

    # Explicit VMEM budget: 2x pipelined input/output tiles + 1x resident
    # weights + live f32/bf16 intermediates, 2x margin, clamped to [32,64] MiB.
    wbytes = jnp.dtype(w1t.dtype).itemsize
    weight_bytes = ((w1t.size + w2t.size) * wbytes
                    + (b1c.size + b2c.size + w3r.size) * 4)
    io_bytes = 2 * (F * TB * 4) + 2 * (TB * 4)
    live_bytes = 2 * H * TB * 4 + 2 * H * TB * wbytes + F * TB * wbytes
    vmem_limit = int(min(64 << 20,
                         max(32 << 20,
                             2 * (weight_bytes + io_bytes + live_bytes) + (4 << 20))))

    out = pl.pallas_call(
        qvalue_kernel,
        out_shape=jax.ShapeDtypeStruct((1, B_pad), jnp.float32),
        grid=(steps,),
        in_specs=[
            pl.BlockSpec((F, TB), lambda i: (0, i)),            # [x;a]^T tile
            resident(w1t),                                      # (H, F)
            resident(b1c),                                      # (H, 1)
            resident(w2t),                                      # (H, H)
            resident(b2c),                                      # (H, 1)
            resident(w3r),                                      # (8, H)
            pl.BlockSpec(memory_space=pltpu.MemorySpace.SMEM),  # b3 (1, 1)
        ],
        out_specs=pl.BlockSpec((1, TB), lambda i: (0, i)),
        compiler_params=pltpu.CompilerParams(
            dimension_semantics=("parallel",),
            vmem_limit_bytes=vmem_limit),
    )(xa_t, w1t, b1c, w2t, b2c, w3r, b3)

    return out.reshape(B_pad, 1)[:B]


def init_params(key, state_dim, hidden_dim, action_dim):
    """Logical params mirroring QValueNet.__init__ (weights stored (in, out),
    i.e. transposed vs torch.nn.Linear, so y = x @ W + b)."""
    in1 = state_dim + action_dim
    k = jax.random.split(key, 6)
    w1 = jax.random.normal(k[0], (in1, hidden_dim), jnp.float32) * 0.1
    b1 = jax.random.normal(k[1], (1, hidden_dim), jnp.float32) * 0.1
    w2 = jax.random.normal(k[2], (hidden_dim, hidden_dim), jnp.float32) * 0.1
    b2 = jax.random.normal(k[3], (1, hidden_dim), jnp.float32) * 0.1
    w3 = jax.random.normal(k[4], (hidden_dim, 1), jnp.float32) * 0.1
    b3 = jax.random.normal(k[5], (1, 1), jnp.float32) * 0.1
    return (w1, b1, w2, b2, w3, b3)


def prepare_params(params, *, compute_dtype=jnp.bfloat16):
    """One-time layout prep: transpose to feature-major (y^T = W @ x^T, i.e.
    torch's (out, in) layout), zero-pad the hidden dim to a multiple of 128
    lanes (math-preserving: padded units stay exactly 0 through both ReLUs),
    cast the two big matmul weights to the MXU compute dtype; biases and the
    fc_out head stay float32."""
    w1, b1, w2, b2, w3, b3 = params
    hidden = w1.shape[1]
    H = _round_up(hidden, LANES)
    ph = H - hidden

    w1t = jnp.pad(w1, ((0, 0), (0, ph))).T.astype(compute_dtype)   # (H, F)
    b1c = jnp.pad(b1, ((0, 0), (0, ph))).T                          # (H, 1) f32
    w2t = jnp.pad(w2, ((0, ph), (0, ph))).T.astype(compute_dtype)   # (H, H)
    b2c = jnp.pad(b2, ((0, 0), (0, ph))).T                          # (H, 1) f32
    # fc_out head as an (8, H) f32 block: row 0 = w3^T, rows 1..7 zero, so the
    # final matmul has a full-sublane LHS; the kernel slices row 0.
    w3r = jnp.pad(w3.T, ((0, 7), (0, ph)))                          # (8, H) f32
    return (w1t, b1c, w2t, b2c, w3r, b3)


def reference_forward(x, a, params, compute_dtype=jnp.float32):
    """Pure-JAX reference of the PyTorch forward (optionally with the same
    bf16 matmul quantization as the kernel's fast path)."""
    w1, b1, w2, b2, w3, b3 = params
    hp = jax.lax.Precision.HIGHEST
    mm = lambda u, w: jnp.dot(u.astype(compute_dtype), w.astype(compute_dtype),
                              preferred_element_type=jnp.float32, precision=hp)
    cat = jnp.concatenate([x, a], axis=1)
    h1 = jnp.maximum(mm(cat, w1) + b1, 0.0)
    h2 = jnp.maximum(mm(h1, w2) + b2, 0.0)
    return jnp.dot(h2, w3, precision=hp) + b3      # head stays f32 (as in kernel)


if __name__ == "__main__":
    key = jax.random.PRNGKey(0)
    B, state_dim, action_dim, hidden_dim = 2, 8, 4, 32

    kx, ka, kp = jax.random.split(key, 3)
    x = jax.random.normal(kx, (B, state_dim), jnp.float32)
    a = jax.random.normal(ka, (B, action_dim), jnp.float32)
    params = init_params(kp, state_dim, hidden_dim, action_dim)

    # Exact check: f32 compute path vs pure-f32 reference.
    kparams_f32 = prepare_params(params, compute_dtype=jnp.float32)
    out_f32 = qvalue_forward(x, a, kparams_f32)
    jax.block_until_ready(out_f32)
    ref_f32 = reference_forward(x, a, params, compute_dtype=jnp.float32)
    assert out_f32.shape == (B, 1)
    assert jnp.allclose(out_f32, ref_f32, atol=1e-4, rtol=1e-4)

    # Fast path (default): bf16 MXU operands, f32 accumulate / bias / ReLU / head.
    kparams_bf16 = prepare_params(params, compute_dtype=jnp.bfloat16)
    out_bf16 = qvalue_forward(x, a, kparams_bf16)
    jax.block_until_ready(out_bf16)
    ref_bf16 = reference_forward(x, a, params, compute_dtype=jnp.bfloat16)
    assert out_bf16.shape == (B, 1)
    assert jnp.allclose(out_bf16, ref_bf16, atol=5e-2, rtol=5e-2)

    # Multi-step grid: exercises batch padding, >=2 grid steps (megacore path)
    # and the lane-packed output across steps.
    B2 = 300
    kx2, ka2 = jax.random.split(jax.random.PRNGKey(1))
    x2 = jax.random.normal(kx2, (B2, state_dim), jnp.float32)
    a2 = jax.random.normal(ka2, (B2, action_dim), jnp.float32)
    out2 = qvalue_forward(x2, a2, kparams_f32, tile_b=256)
    jax.block_until_ready(out2)
    ref2 = reference_forward(x2, a2, params, compute_dtype=jnp.float32)
    assert out2.shape == (B2, 1)
    assert jnp.allclose(out2, ref2, atol=1e-4, rtol=1e-4)

    print("KERNEL_OK")
</pallas_src>

<mosaic_0001>
module attributes {stable_mosaic.version = 11 : i64} {
  func.func @qvalue_kernel(%arg0: i32, %arg1: memref<12x128xf32, #tpu.memory_space<vmem>>, %arg2: memref<128x12xf32, #tpu.memory_space<vmem>>, %arg3: memref<128x1xf32, #tpu.memory_space<vmem>>, %arg4: memref<128x128xf32, #tpu.memory_space<vmem>>, %arg5: memref<128x1xf32, #tpu.memory_space<vmem>>, %arg6: memref<8x128xf32, #tpu.memory_space<vmem>>, %arg7: memref<1x1xf32, #tpu.memory_space<smem>>, %arg8: memref<1x128xf32, #tpu.memory_space<vmem>>) attributes {dimension_semantics = [#tpu.dimension_semantics<parallel>], iteration_bounds = array<i64: 1>, scalar_prefetch = 0 : i64, scratch_operands = 0 : i64, tpu.core_type = #tpu.core_type<tc>, window_params = [{transform_indices = @transform_0, window_bounds = array<i64: 12, 128>}, {pipeline_mode = #tpu.pipeline_mode<synchronous>, transform_indices = @transform_1, window_bounds = array<i64: 128, 12>}, {pipeline_mode = #tpu.pipeline_mode<synchronous>, transform_indices = @transform_2, window_bounds = array<i64: 128, 1>}, {pipeline_mode = #tpu.pipeline_mode<synchronous>, transform_indices = @transform_3, window_bounds = array<i64: 128, 128>}, {pipeline_mode = #tpu.pipeline_mode<synchronous>, transform_indices = @transform_4, window_bounds = array<i64: 128, 1>}, {pipeline_mode = #tpu.pipeline_mode<synchronous>, transform_indices = @transform_5, window_bounds = array<i64: 8, 128>}, {transform_indices = @transform_6, window_bounds = array<i64: 1, 1>}, {transform_indices = @transform_7, window_bounds = array<i64: 1, 128>}]} {
    %c0 = arith.constant 0 : index
    %c0_0 = arith.constant 0 : index
    %0 = vector.load %arg1[%c0, %c0_0] : memref<12x128xf32, #tpu.memory_space<vmem>>, vector<12x128xf32>
    %c0_1 = arith.constant 0 : index
    %c0_2 = arith.constant 0 : index
    %1 = vector.load %arg2[%c0_1, %c0_2] : memref<128x12xf32, #tpu.memory_space<vmem>>, vector<128x12xf32>
    %cst = arith.constant dense<0.000000e+00> : vector<128x128xf32>
    %2 = tpu.matmul %1, %0, %cst {dimension_numbers = #tpu.dot_dimension_numbers<[1], [0], [0], [1], [0, 0, 1, 1], [], []>} : vector<128x12xf32>, vector<12x128xf32>, vector<128x128xf32> -> vector<128x128xf32>
    %c0_3 = arith.constant 0 : index
    %c0_4 = arith.constant 0 : index
    %3 = vector.load %arg3[%c0_3, %c0_4] : memref<128x1xf32, #tpu.memory_space<vmem>>, vector<128x1xf32>
    %4 = vector.broadcast %3 : vector<128x1xf32> to vector<128x128xf32>
    %5 = arith.addf %2, %4 : vector<128x128xf32>
    %cst_5 = arith.constant 0.000000e+00 : f32
    %6 = vector.broadcast %cst_5 : f32 to vector<128x128xf32>
    %7 = arith.maximumf %5, %6 : vector<128x128xf32>
    %c0_6 = arith.constant 0 : index
    %c0_7 = arith.constant 0 : index
    %8 = vector.load %arg4[%c0_6, %c0_7] : memref<128x128xf32, #tpu.memory_space<vmem>>, vector<128x128xf32>
    %cst_8 = arith.constant dense<0.000000e+00> : vector<128x128xf32>
    %9 = tpu.matmul %8, %7, %cst_8 {dimension_numbers = #tpu.dot_dimension_numbers<[1], [0], [0], [1], [0, 0, 1, 1], [], []>} : vector<128x128xf32>, vector<128x128xf32>, vector<128x128xf32> -> vector<128x128xf32>
    %c0_9 = arith.constant 0 : index
    %c0_10 = arith.constant 0 : index
    %10 = vector.load %arg5[%c0_9, %c0_10] : memref<128x1xf32, #tpu.memory_space<vmem>>, vector<128x1xf32>
    %11 = vector.broadcast %10 : vector<128x1xf32> to vector<128x128xf32>
    %12 = arith.addf %9, %11 : vector<128x128xf32>
    %cst_11 = arith.constant 0.000000e+00 : f32
    %13 = vector.broadcast %cst_11 : f32 to vector<128x128xf32>
    %14 = arith.maximumf %12, %13 : vector<128x128xf32>
    %c0_12 = arith.constant 0 : index
    %c0_13 = arith.constant 0 : index
    %15 = vector.load %arg6[%c0_12, %c0_13] : memref<8x128xf32, #tpu.memory_space<vmem>>, vector<8x128xf32>
    %cst_14 = arith.constant dense<0.000000e+00> : vector<8x128xf32>
    %16 = tpu.matmul %15, %14, %cst_14 {dimension_numbers = #tpu.dot_dimension_numbers<[1], [0], [0], [1], [0, 0, 1, 1], [], []>} : vector<8x128xf32>, vector<128x128xf32>, vector<8x128xf32> -> vector<8x128xf32>
    %17 = vector.extract_strided_slice %16 {offsets = [0, 0], sizes = [1, 128], strides = [1, 1]} : vector<8x128xf32> to vector<1x128xf32>
    %c0_15 = arith.constant 0 : index
    %c0_16 = arith.constant 0 : index
    %18 = memref.load %arg7[%c0_15, %c0_16] : memref<1x1xf32, #tpu.memory_space<smem>>
    %19 = vector.broadcast %18 : f32 to vector<1x128xf32>
    %20 = arith.addf %17, %19 : vector<1x128xf32>
    %c0_17 = arith.constant 0 : index
    %c0_18 = arith.constant 0 : index
    %21 = vector.load %arg8[%c0_17, %c0_18] : memref<1x128xf32, #tpu.memory_space<vmem>>, vector<1x128xf32>
    tpu.vector_store %arg8[%c0_17, %c0_18], %20 {strides = array<i32>} : memref<1x128xf32, #tpu.memory_space<vmem>>, vector<1x128xf32>,
    return
  }
  func.func @transform_0(%arg0: i32) -> (i32, i32) {
    %c0_i32 = arith.constant 0 : i32
    %c0_i32_0 = arith.constant 0 : i32
    return %c0_i32, %arg0 : i32, i32
  }
  func.func @transform_1(%arg0: i32) -> (i32, i32) {
    %c0_i32 = arith.constant 0 : i32
    %c0_i32_0 = arith.constant 0 : i32
    %c0_i32_1 = arith.constant 0 : i32
    return %c0_i32, %c0_i32_0 : i32, i32
  }
  func.func @transform_2(%arg0: i32) -> (i32, i32) {
    %c0_i32 = arith.constant 0 : i32
    %c0_i32_0 = arith.constant 0 : i32
    %c0_i32_1 = arith.constant 0 : i32
    return %c0_i32, %c0_i32_0 : i32, i32
  }
  func.func @transform_3(%arg0: i32) -> (i32, i32) {
    %c0_i32 = arith.constant 0 : i32
    %c0_i32_0 = arith.constant 0 : i32
    %c0_i32_1 = arith.constant 0 : i32
    return %c0_i32, %c0_i32_0 : i32, i32
  }
  func.func @transform_4(%arg0: i32) -> (i32, i32) {
    %c0_i32 = arith.constant 0 : i32
    %c0_i32_0 = arith.constant 0 : i32
    %c0_i32_1 = arith.constant 0 : i32
    return %c0_i32, %c0_i32_0 : i32, i32
  }
  func.func @transform_5(%arg0: i32) -> (i32, i32) {
    %c0_i32 = arith.constant 0 : i32
    %c0_i32_0 = arith.constant 0 : i32
    %c0_i32_1 = arith.constant 0 : i32
    return %c0_i32, %c0_i32_0 : i32, i32
  }
  func.func @transform_6(%arg0: i32) -> (i32, i32) {
    %c0_i32 = arith.constant 0 : i32
    %c0_i32_0 = arith.constant 0 : i32
    %c0_i32_1 = arith.constant 0 : i32
    return %c0_i32, %c0_i32_0 : i32, i32
  }
  func.func @transform_7(%arg0: i32) -> (i32, i32) {
    %c0_i32 = arith.constant 0 : i32
    %c0_i32_0 = arith.constant 0 : i32
    return %c0_i32, %arg0 : i32, i32
  }
}

</mosaic_0001>

<llo_original>
// kernel: tpu_custom_call.1
$region0: #{tpu_custom_call.1}
  #allocation0 [shape = 'u32[]', space=smem, size = 0x4, offset = 0x4, fixed_abs, tag = 'smem constant byte address 0x4 - core index']
  #allocation1 [shape = 'u32[144,128]{1,0:T(1,128)}', space=vmem, size = 0x12000, scoped, tag = 'internal scratch']
  #allocation2 [shape = 'f32[1,1]{1,0:T(1,128)S(6)}', space=smem, size = 0x200, scoped, tag = 'scoped memory for tpu_custom_call.1']
  %s0 = inlined_call_operand.vmem [shape: f32[12,128], index: 0, kind: input, shape index: {}]
  %s1 = inlined_call_operand.vmem [shape: f32[128,12], index: 1, kind: input, shape index: {}]
  %s2 = inlined_call_operand.vmem [shape: f32[128,1], index: 2, kind: input, shape index: {}]
  %s3 = inlined_call_operand.vmem [shape: f32[128,128], index: 3, kind: input, shape index: {}]
  %s4 = inlined_call_operand.vmem [shape: f32[128,1], index: 4, kind: input, shape index: {}]
  %s5 = inlined_call_operand.vmem [shape: f32[8,128], index: 5, kind: input, shape index: {}]
  %s6 = inlined_call_operand.<no memory space> [shape: f32[1,1], index: 6, kind: input, shape index: {}]
  %s7 = inlined_call_operand.hbm [shape: f32[1,128], index: 7, kind: output, shape index: {}]
  %s8 = sld [smem:[#allocation0]]
  $region38: #{tpu_custom_call.1} parent=0
    _
  %s10 = ssub.s32 1, %s8
  %s11 = scalar_select 0, %s10, %s8
  %12 = sst [smem:[#allocation2]] %s6
  $region1: #{tpu_custom_call.1} parent=0
    #allocation3 [shape = 'u8[512]{0}', space=vmem, size = 0x400, scoped, tag = 'output window, operand 0, single buffered']
    #allocation4 [shape = 's32[1]{0}', space=sflag, size = 0x4, scoped, tag = 'scoped memory for tpu_custom_call.1']
    %13 = vsyncpa [#allocation4], 0
    // Predicated region
    $region2: #{tpu_custom_call.1} parent=1 // pred_check
      _
    $region3: #{tpu_custom_call.1} parent=1 // pred_check_branch
      %15 = sbr.rel (0) target = $region5
    $region4: #{tpu_custom_call.1} parent=1 // pred_region
      _
    $region5: #{tpu_custom_call.1} parent=1 // pred_fallthru
      _
    // Predicated region
    $region6: #{tpu_custom_call.1} parent=1 // pred_check
      _
    $region7: #{tpu_custom_call.1} parent=1 // pred_check_branch
      %17 = sbr.rel (0) target = $region9
    $region8: #{tpu_custom_call.1} parent=1 // pred_region
      _
    $region9: #{tpu_custom_call.1} parent=1 // pred_fallthru
      _
    // Predicated region
    $region10: #{tpu_custom_call.1} parent=1 // pred_check
      _
    $region11: #{tpu_custom_call.1} parent=1 // pred_check_branch
      %19 = sbr.rel (0) target = $region13
    $region12: #{tpu_custom_call.1} parent=1 // pred_region
      _
    $region13: #{tpu_custom_call.1} parent=1 // pred_fallthru
      _
    // Predicated region
    $region14: #{tpu_custom_call.1} parent=1 // pred_check
      _
    $region15: #{tpu_custom_call.1} parent=1 // pred_check_branch
      %21 = sbr.rel (0) target = $region17
    $region16: #{tpu_custom_call.1} parent=1 // pred_region
      _
    $region17: #{tpu_custom_call.1} parent=1 // pred_fallthru
      _
    // Predicated region
    $region18: #{tpu_custom_call.1} parent=1 // pred_check
      _
    $region19: #{tpu_custom_call.1} parent=1 // pred_check_branch
      %23 = sbr.rel (0) target = $region21
    $region20: #{tpu_custom_call.1} parent=1 // pred_region
      _
    $region21: #{tpu_custom_call.1} parent=1 // pred_fallthru
      _
    // Predicated region
    $region22: #{tpu_custom_call.1} parent=1 // pred_check
      _
    $region23: #{tpu_custom_call.1} parent=1 // pred_check_branch
      %25 = sbr.rel (0) target = $region25
    $region24: #{tpu_custom_call.1} parent=1 // pred_region
      _
    $region25: #{tpu_custom_call.1} parent=1 // pred_fallthru
      _
    // Predicated region
    $region26: #{tpu_custom_call.1} parent=1 // pred_check
      _
    $region27: #{tpu_custom_call.1} parent=1 // pred_check_branch
      %27 = sbr.rel (0) target = $region29
    $region28: #{tpu_custom_call.1} parent=1 // pred_region
      _
    $region29: #{tpu_custom_call.1} parent=1 // pred_fallthru
      _
    %v28 = vld [vmem:[%s0] sm:$0xff]
    %v29 = vld [vmem:[%s0 + $0x8] sm:$0xf]
    %v30 = vld [vmem:[%s1] sm:$0xff]
    %v31 = vld [vmem:[%s1 + $0x8] sm:$0xff]
    %v32 = vld [vmem:[%s1 + $0x10] sm:$0xff]
    %v33 = vld [vmem:[%s1 + $0x18] sm:$0xff]
    %v34 = vld [vmem:[%s1 + $0x20] sm:$0xff]
    %v35 = vld [vmem:[%s1 + $0x28] sm:$0xff]
    %v36 = vld [vmem:[%s1 + $0x30] sm:$0xff]
    %v37 = vld [vmem:[%s1 + $0x38] sm:$0xff]
    %v38 = vld [vmem:[%s1 + $0x40] sm:$0xff]
    %v39 = vld [vmem:[%s1 + $0x48] sm:$0xff]
    %v40 = vld [vmem:[%s1 + $0x50] sm:$0xff]
    %v41 = vld [vmem:[%s1 + $0x58] sm:$0xff]
    %v42 = vld [vmem:[%s1 + $0x60] sm:$0xff]
    %v43 = vld [vmem:[%s1 + $0x68] sm:$0xff]
    %v44 = vld [vmem:[%s1 + $0x70] sm:$0xff]
    %v45 = vld [vmem:[%s1 + $0x78] sm:$0xff]
    %v46 = vld [vmem:[%s2] sm:$0xff]
    %v47 = vld [vmem:[%s2 + $0x8] sm:$0xff]
    %v48 = vld [vmem:[%s2 + $0x10] sm:$0xff]
    %v49 = vld [vmem:[%s2 + $0x18] sm:$0xff]
    %v50 = vld [vmem:[%s2 + $0x20] sm:$0xff]
    %v51 = vld [vmem:[%s2 + $0x28] sm:$0xff]
    %v52 = vld [vmem:[%s2 + $0x30] sm:$0xff]
    %v53 = vld [vmem:[%s2 + $0x38] sm:$0xff]
    %v54 = vld [vmem:[%s2 + $0x40] sm:$0xff]
    %v55 = vld [vmem:[%s2 + $0x48] sm:$0xff]
    %v56 = vld [vmem:[%s2 + $0x50] sm:$0xff]
    %v57 = vld [vmem:[%s2 + $0x58] sm:$0xff]
    %v58 = vld [vmem:[%s2 + $0x60] sm:$0xff]
    %v59 = vld [vmem:[%s2 + $0x68] sm:$0xff]
    %v60 = vld [vmem:[%s2 + $0x70] sm:$0xff]
    %v61 = vld [vmem:[%s2 + $0x78] sm:$0xff]
    %63 = vset.pattern.permute.xlu0 0
    %64 = vperm.xlu0 %63, %v46
    %v65 = vpop.permute.xlu0 %64
    %68 = vset.pattern.permute.xlu0 0
    %69 = vperm.xlu0 %68, %v47
    %v70 = vpop.permute.xlu0 %69
    %73 = vset.pattern.permute.xlu0 0
    %74 = vperm.xlu0 %73, %v48
    %v75 = vpop.permute.xlu0 %74
    %78 = vset.pattern.permute.xlu0 0
    %79 = vperm.xlu0 %78, %v49
    %v80 = vpop.permute.xlu0 %79
    %83 = vset.pattern.permute.xlu0 0
    %84 = vperm.xlu0 %83, %v50
    %v85 = vpop.permute.xlu0 %84
    %88 = vset.pattern.permute.xlu0 0
    %89 = vperm.xlu0 %88, %v51
    %v90 = vpop.permute.xlu0 %89
    %93 = vset.pattern.permute.xlu0 0
    %94 = vperm.xlu0 %93, %v52
    %v95 = vpop.permute.xlu0 %94
    %98 = vset.pattern.permute.xlu0 0
    %99 = vperm.xlu0 %98, %v53
    %v100 = vpop.permute.xlu0 %99
    %103 = vset.pattern.permute.xlu0 0
    %104 = vperm.xlu0 %103, %v54
    %v105 = vpop.permute.xlu0 %104
    %108 = vset.pattern.permute.xlu0 0
    %109 = vperm.xlu0 %108, %v55
    %v110 = vpop.permute.xlu0 %109
    %113 = vset.pattern.permute.xlu0 0
    %114 = vperm.xlu0 %113, %v56
    %v115 = vpop.permute.xlu0 %114
    %118 = vset.pattern.permute.xlu0 0
    %119 = vperm.xlu0 %118, %v57
    %v120 = vpop.permute.xlu0 %119
    %123 = vset.pattern.permute.xlu0 0
    %124 = vperm.xlu0 %123, %v58
    %v125 = vpop.permute.xlu0 %124
    %128 = vset.pattern.permute.xlu0 0
    %129 = vperm.xlu0 %128, %v59
    %v130 = vpop.permute.xlu0 %129
    %133 = vset.pattern.permute.xlu0 0
    %134 = vperm.xlu0 %133, %v60
    %v135 = vpop.permute.xlu0 %134
    %138 = vset.pattern.permute.xlu0 0
    %139 = vperm.xlu0 %138, %v61
    %v140 = vpop.permute.xlu0 %139
    %vm142 = vcmask 97280
    %v144 = vsel %vm142, %v30, 0
    %v147 = vsel %vm142, %v31, 0
    %v150 = vsel %vm142, %v32, 0
    %v153 = vsel %vm142, %v33, 0
    %v156 = vsel %vm142, %v34, 0
    %v159 = vsel %vm142, %v35, 0
    %v162 = vsel %vm142, %v36, 0
    %v165 = vsel %vm142, %v37, 0
    %v168 = vsel %vm142, %v38, 0
    %v171 = vsel %vm142, %v39, 0
    %v174 = vsel %vm142, %v40, 0
    %v177 = vsel %vm142, %v41, 0
    %v180 = vsel %vm142, %v42, 0
    %v183 = vsel %vm142, %v43, 0
    %v186 = vsel %vm142, %v44, 0
    %v189 = vsel %vm142, %v45, 0
    %vm191 = vcmask 1043456
    %v193 = vsel %vm191, %v29, 0
    %195 = vmatprep.subr.mxu0 0.0
    %196 = vmatpush1.msra.mxu0 %v28
    %197 = vmatprep.subr.mxu0 0.0
    %198 = vmatpush1.msra.mxu0 %v193
    %199 = vmatprep.subr.mxu0 0.0
    %200 = vmatpush1.msra.mxu0 0.0
    %201 = vmatprep.subr.mxu0 0.0
    %202 = vmatpush1.msra.mxu0 0.0
    %203 = vmatprep.subr.mxu0 0.0
    %204 = vmatpush1.msra.mxu0 0.0
    %205 = vmatprep.subr.mxu0 0.0
    %206 = vmatpush1.msra.mxu0 0.0
    %207 = vmatprep.subr.mxu0 0.0
    %208 = vmatpush1.msra.mxu0 0.0
    %209 = vmatprep.subr.mxu0 0.0
    %210 = vmatpush1.msra.mxu0 0.0
    %211 = vmatprep.subr.mxu0 0.0
    %212 = vmatpush1.msra.mxu0 0.0
    %213 = vmatprep.subr.mxu0 0.0
    %214 = vmatpush1.msra.mxu0 0.0
    %215 = vmatprep.subr.mxu0 0.0
    %216 = vmatpush1.msra.mxu0 0.0
    %217 = vmatprep.subr.mxu0 0.0
    %218 = vmatpush1.msra.mxu0 0.0
    %219 = vmatprep.subr.mxu0 0.0
    %220 = vmatpush1.msra.mxu0 0.0
    %221 = vmatprep.subr.mxu0 0.0
    %222 = vmatpush1.msra.mxu0 0.0
    %223 = vmatprep.subr.mxu0 0.0
    %224 = vmatpush1.msra.mxu0 0.0
    %225 = vmatprep.subr.mxu0 0.0
    %226 = vmatpush1.msra.mxu0 0.0
    %227 = vmatprep.subr.mxu0 0.0
    %228 = vmatpush1.msra.mxu0 0.0
    %229 = vmatprep.subr.mxu0 0.0
    %230 = vmatpush1.msra.mxu0 0.0
    %231 = vmatprep.subr.mxu0 0.0
    %232 = vmatpush1.msra.mxu0 0.0
    %233 = vmatprep.subr.mxu0 0.0
    %234 = vmatpush1.msra.mxu0 0.0
    %235 = vmatprep.subr.mxu0 0.0
    %236 = vmatpush1.msra.mxu0 0.0
    %237 = vmatprep.subr.mxu0 0.0
    %238 = vmatpush1.msra.mxu0 0.0
    %239 = vmatprep.subr.mxu0 0.0
    %240 = vmatpush1.msra.mxu0 0.0
    %241 = vmatprep.subr.mxu0 0.0
    %242 = vmatpush1.msra.mxu0 0.0
    %243 = vmatprep.subr.mxu0 0.0
    %244 = vmatpush1.msra.mxu0 0.0
    %245 = vmatprep.subr.mxu0 0.0
    %246 = vmatpush1.msra.mxu0 0.0
    %247 = vmatprep.subr.mxu0 0.0
    %248 = vmatpush1.msra.mxu0 0.0
    %249 = vmatprep.subr.mxu0 0.0
    %250 = vmatpush1.msra.mxu0 0.0
    %251 = vmatprep.subr.mxu0 0.0
    %252 = vmatpush1.msra.mxu0 0.0
    %253 = vmatprep.subr.mxu0 0.0
    %254 = vmatpush1.msra.mxu0 0.0
    %255 = vmatprep.subr.mxu0 0.0
    %256 = vmatpush1.msra.mxu0 0.0
    %257 = vmatprep.subr.mxu0 0.0
    %258 = vmatpush1.msra.mxu0 0.0
    %259 = vmatprep.mubr.f32.mxu0 0.0
    %260 = vmatmul.mubr.f32.gmra.mrb[0].mxu0 %v144
    %v261 = vpop.f32.mrb[0].mxu0
    %v262 = vadd.f32 %v65, %v261
    %v263 = vpop.f32.mrb[0].mxu0
    %264 = vmatprep.mubr.f32.mxu0 0.0
    %265 = vmatmul.mubr.f32.gmra.mrb[0].mxu0 %v147
    %v266 = vpop.f32.mrb[0].mxu0
    %v267 = vadd.f32 %v70, %v266
    %v268 = vpop.f32.mrb[0].mxu0
    %269 = vmatprep.mubr.f32.mxu0 0.0
    %270 = vmatmul.mubr.f32.gmra.mrb[0].mxu0 %v150
    %v271 = vpop.f32.mrb[0].mxu0
    %v272 = vadd.f32 %v75, %v271
    %v273 = vpop.f32.mrb[0].mxu0
    %274 = vmatprep.mubr.f32.mxu0 0.0
    %275 = vmatmul.mubr.f32.gmra.mrb[0].mxu0 %v153
    %v276 = vpop.f32.mrb[0].mxu0
    %v277 = vadd.f32 %v80, %v276
    %v278 = vpop.f32.mrb[0].mxu0
    %279 = vmatprep.mubr.f32.mxu0 0.0
    %280 = vmatmul.mubr.f32.gmra.mrb[0].mxu0 %v156
    %v281 = vpop.f32.mrb[0].mxu0
    %v282 = vadd.f32 %v85, %v281
    %v283 = vpop.f32.mrb[0].mxu0
    %284 = vmatprep.mubr.f32.mxu0 0.0
    %285 = vmatmul.mubr.f32.gmra.mrb[0].mxu0 %v159
    %v286 = vpop.f32.mrb[0].mxu0
    %v287 = vadd.f32 %v90, %v286
    %v288 = vpop.f32.mrb[0].mxu0
    %289 = vmatprep.mubr.f32.mxu0 0.0
    %290 = vmatmul.mubr.f32.gmra.mrb[0].mxu0 %v162
    %v291 = vpop.f32.mrb[0].mxu0
    %v292 = vadd.f32 %v95, %v291
    %v293 = vpop.f32.mrb[0].mxu0
    %294 = vmatprep.mubr.f32.mxu0 0.0
    %295 = vmatmul.mubr.f32.gmra.mrb[0].mxu0 %v165
    %v296 = vpop.f32.mrb[0].mxu0
    %v297 = vadd.f32 %v100, %v296
    %v298 = vpop.f32.mrb[0].mxu0
    %299 = vmatprep.mubr.f32.mxu0 0.0
    %300 = vmatmul.mubr.f32.gmra.mrb[0].mxu0 %v168
    %v301 = vpop.f32.mrb[0].mxu0
    %v302 = vadd.f32 %v105, %v301
    %v303 = vpop.f32.mrb[0].mxu0
    %304 = vmatprep.mubr.f32.mxu0 0.0
    %305 = vmatmul.mubr.f32.gmra.mrb[0].mxu0 %v171
    %v306 = vpop.f32.mrb[0].mxu0
    %v307 = vadd.f32 %v110, %v306
    %v308 = vpop.f32.mrb[0].mxu0
    %309 = vmatprep.mubr.f32.mxu0 0.0
    %310 = vmatmul.mubr.f32.gmra.mrb[0].mxu0 %v174
    %v311 = vpop.f32.mrb[0].mxu0
    %v312 = vadd.f32 %v115, %v311
    %v313 = vpop.f32.mrb[0].mxu0
    %314 = vmatprep.mubr.f32.mxu0 0.0
    %315 = vmatmul.mubr.f32.gmra.mrb[0].mxu0 %v177
    %v316 = vpop.f32.mrb[0].mxu0
    %v317 = vadd.f32 %v120, %v316
    %v318 = vpop.f32.mrb[0].mxu0
    %319 = vmatprep.mubr.f32.mxu0 0.0
    %320 = vmatmul.mubr.f32.gmra.mrb[0].mxu0 %v180
    %v321 = vpop.f32.mrb[0].mxu0
    %v322 = vadd.f32 %v125, %v321
    %v323 = vpop.f32.mrb[0].mxu0
    %324 = vmatprep.mubr.f32.mxu0 0.0
    %325 = vmatmul.mubr.f32.gmra.mrb[0].mxu0 %v183
    %v326 = vpop.f32.mrb[0].mxu0
    %v327 = vadd.f32 %v130, %v326
    %v328 = vpop.f32.mrb[0].mxu0
    %329 = vmatprep.mubr.f32.mxu0 0.0
    %330 = vmatmul.mubr.f32.gmra.mrb[0].mxu0 %v186
    %v331 = vpop.f32.mrb[0].mxu0
    %v332 = vadd.f32 %v135, %v331
    %v333 = vpop.f32.mrb[0].mxu0
    %334 = vmatprep.mubr.f32.mxu0 0.0
    %335 = vmatmul.mubr.f32.gmra.mrb[0].mxu0 %v189
    %v336 = vpop.f32.mrb[0].mxu0
    %v337 = vadd.f32 %v140, %v336
    %v338 = vpop.f32.mrb[0].mxu0
    %339 = vdwg.mxu0
    %v340 = vmax.f32 %v262, 0.0
    %v341 = vmax.f32 %v267, 0.0
    %v342 = vmax.f32 %v272, 0.0
    %v343 = vmax.f32 %v277, 0.0
    %v344 = vmax.f32 %v282, 0.0
    %v345 = vmax.f32 %v287, 0.0
    %v346 = vmax.f32 %v292, 0.0
    %v347 = vmax.f32 %v297, 0.0
    %v348 = vmax.f32 %v302, 0.0
    %v349 = vmax.f32 %v307, 0.0
    %v350 = vmax.f32 %v312, 0.0
    %v351 = vmax.f32 %v317, 0.0
    %v352 = vmax.f32 %v322, 0.0
    %v353 = vmax.f32 %v327, 0.0
    %v354 = vmax.f32 %v332, 0.0
    %v355 = vmax.f32 %v337, 0.0
    %v356 = vld [vmem:[%s3] sm:$0xff]
    %v357 = vld [vmem:[%s3 + $0x8] sm:$0xff]
    %v358 = vld [vmem:[%s3 + $0x10] sm:$0xff]
    %v359 = vld [vmem:[%s3 + $0x18] sm:$0xff]
    %v360 = vld [vmem:[%s3 + $0x20] sm:$0xff]
    %v361 = vld [vmem:[%s3 + $0x28] sm:$0xff]
    %v362 = vld [vmem:[%s3 + $0x30] sm:$0xff]
    %v363 = vld [vmem:[%s3 + $0x38] sm:$0xff]
    %v364 = vld [vmem:[%s3 + $0x40] sm:$0xff]
    %v365 = vld [vmem:[%s3 + $0x48] sm:$0xff]
    %v366 = vld [vmem:[%s3 + $0x50] sm:$0xff]
    %v367 = vld [vmem:[%s3 + $0x58] sm:$0xff]
    %v368 = vld [vmem:[%s3 + $0x60] sm:$0xff]
    %v369 = vld [vmem:[%s3 + $0x68] sm:$0xff]
    %v370 = vld [vmem:[%s3 + $0x70] sm:$0xff]
    %v371 = vld [vmem:[%s3 + $0x78] sm:$0xff]
    %v372 = vld [vmem:[%s4] sm:$0xff]
    %v373 = vld [vmem:[%s4 + $0x8] sm:$0xff]
    %v374 = vld [vmem:[%s4 + $0x10] sm:$0xff]
    %v375 = vld [vmem:[%s4 + $0x18] sm:$0xff]
    %v376 = vld [vmem:[%s4 + $0x20] sm:$0xff]
    %v377 = vld [vmem:[%s4 + $0x28] sm:$0xff]
    %v378 = vld [vmem:[%s4 + $0x30] sm:$0xff]
    %v379 = vld [vmem:[%s4 + $0x38] sm:$0xff]
    %v380 = vld [vmem:[%s4 + $0x40] sm:$0xff]
    %v381 = vld [vmem:[%s4 + $0x48] sm:$0xff]
    %v382 = vld [vmem:[%s4 + $0x50] sm:$0xff]
    %v383 = vld [vmem:[%s4 + $0x58] sm:$0xff]
    %v384 = vld [vmem:[%s4 + $0x60] sm:$0xff]
    %v385 = vld [vmem:[%s4 + $0x68] sm:$0xff]
    %v386 = vld [vmem:[%s4 + $0x70] sm:$0xff]
    %v387 = vld [vmem:[%s4 + $0x78] sm:$0xff]
    %389 = vset.pattern.permute.xlu0 0
    %390 = vperm.xlu0 %389, %v372
    %v391 = vpop.permute.xlu0 %390
    %394 = vset.pattern.permute.xlu0 0
    %395 = vperm.xlu0 %394, %v373
    %v396 = vpop.permute.xlu0 %395
    %399 = vset.pattern.permute.xlu0 0
    %400 = vperm.xlu0 %399, %v374
    %v401 = vpop.permute.xlu0 %400
    %404 = vset.pattern.permute.xlu0 0
    %405 = vperm.xlu0 %404, %v375
    %v406 = vpop.permute.xlu0 %405
    %409 = vset.pattern.permute.xlu0 0
    %410 = vperm.xlu0 %409, %v376
    %v411 = vpop.permute.xlu0 %410
    %414 = vset.pattern.permute.xlu0 0
    %415 = vperm.xlu0 %414, %v377
    %v416 = vpop.permute.xlu0 %415
    %419 = vset.pattern.permute.xlu0 0
    %420 = vperm.xlu0 %419, %v378
    %v421 = vpop.permute.xlu0 %420
    %424 = vset.pattern.permute.xlu0 0
    %425 = vperm.xlu0 %424, %v379
    %v426 = vpop.permute.xlu0 %425
    %429 = vset.pattern.permute.xlu0 0
    %430 = vperm.xlu0 %429, %v380
    %v431 = vpop.permute.xlu0 %430
    %434 = vset.pattern.permute.xlu0 0
    %435 = vperm.xlu0 %434, %v381
    %v436 = vpop.permute.xlu0 %435
    %439 = vset.pattern.permute.xlu0 0
    %440 = vperm.xlu0 %439, %v382
    %v441 = vpop.permute.xlu0 %440
    %444 = vset.pattern.permute.xlu0 0
    %445 = vperm.xlu0 %444, %v383
    %v446 = vpop.permute.xlu0 %445
    %449 = vset.pattern.permute.xlu0 0
    %450 = vperm.xlu0 %449, %v384
    %v451 = vpop.permute.xlu0 %450
    %454 = vset.pattern.permute.xlu0 0
    %455 = vperm.xlu0 %454, %v385
    %v456 = vpop.permute.xlu0 %455
    %459 = vset.pattern.permute.xlu0 0
    %460 = vperm.xlu0 %459, %v386
    %v461 = vpop.permute.xlu0 %460
    %464 = vset.pattern.permute.xlu0 0
    %465 = vperm.xlu0 %464, %v387
    %v466 = vpop.permute.xlu0 %465
    %468 = vmatprep.subr.mxu0 0.0
    %469 = vmatpush1.msra.mxu0 %v340
    %470 = vmatprep.subr.mxu0 0.0
    %471 = vmatpush1.msra.mxu0 %v341
    %472 = vmatprep.subr.mxu0 0.0
    %473 = vmatpush1.msra.mxu0 %v342
    %474 = vmatprep.subr.mxu0 0.0
    %475 = vmatpush1.msra.mxu0 %v343
    %476 = vmatprep.subr.mxu0 0.0
    %477 = vmatpush1.msra.mxu0 %v344
    %478 = vmatprep.subr.mxu0 0.0
    %479 = vmatpush1.msra.mxu0 %v345
    %480 = vmatprep.subr.mxu0 0.0
    %481 = vmatpush1.msra.mxu0 %v346
    %482 = vmatprep.subr.mxu0 0.0
    %483 = vmatpush1.msra.mxu0 %v347
    %484 = vmatprep.subr.mxu0 0.0
    %485 = vmatpush1.msra.mxu0 %v348
    %486 = vmatprep.subr.mxu0 0.0
    %487 = vmatpush1.msra.mxu0 %v349
    %488 = vmatprep.subr.mxu0 0.0
    %489 = vmatpush1.msra.mxu0 %v350
    %490 = vmatprep.subr.mxu0 0.0
    %491 = vmatpush1.msra.mxu0 %v351
    %492 = vmatprep.subr.mxu0 0.0
    %493 = vmatpush1.msra.mxu0 %v352
    %494 = vmatprep.subr.mxu0 0.0
    %495 = vmatpush1.msra.mxu0 %v353
    %496 = vmatprep.subr.mxu0 0.0
    %497 = vmatpush1.msra.mxu0 %v354
    %498 = vmatprep.subr.mxu0 0.0
    %499 = vmatpush1.msra.mxu0 %v355
    %500 = vmatprep.subr.mxu0 0.0
    %501 = vmatpush1.msra.mxu0 0.0
    %502 = vmatprep.subr.mxu0 0.0
    %503 = vmatpush1.msra.mxu0 0.0
    %504 = vmatprep.subr.mxu0 0.0
    %505 = vmatpush1.msra.mxu0 0.0
    %506 = vmatprep.subr.mxu0 0.0
    %507 = vmatpush1.msra.mxu0 0.0
    %508 = vmatprep.subr.mxu0 0.0
    %509 = vmatpush1.msra.mxu0 0.0
    %510 = vmatprep.subr.mxu0 0.0
    %511 = vmatpush1.msra.mxu0 0.0
    %512 = vmatprep.subr.mxu0 0.0
    %513 = vmatpush1.msra.mxu0 0.0
    %514 = vmatprep.subr.mxu0 0.0
    %515 = vmatpush1.msra.mxu0 0.0
    %516 = vmatprep.subr.mxu0 0.0
    %517 = vmatpush1.msra.mxu0 0.0
    %518 = vmatprep.subr.mxu0 0.0
    %519 = vmatpush1.msra.mxu0 0.0
    %520 = vmatprep.subr.mxu0 0.0
    %521 = vmatpush1.msra.mxu0 0.0
    %522 = vmatprep.subr.mxu0 0.0
    %523 = vmatpush1.msra.mxu0 0.0
    %524 = vmatprep.subr.mxu0 0.0
    %525 = vmatpush1.msra.mxu0 0.0
    %526 = vmatprep.subr.mxu0 0.0
    %527 = vmatpush1.msra.mxu0 0.0
    %528 = vmatprep.subr.mxu0 0.0
    %529 = vmatpush1.msra.mxu0 0.0
    %530 = vmatprep.subr.mxu0 0.0
    %531 = vmatpush1.msra.mxu0 0.0
    %532 = vmatprep.mubr.f32.mxu0 0.0
    %533 = vmatmul.mubr.f32.gmra.mrb[0].mxu0 %v356
    %v534 = vpop.f32.mrb[0].mxu0
    %v535 = vadd.f32 %v391, %v534
    %v536 = vpop.f32.mrb[0].mxu0
    %537 = vmatprep.mubr.f32.mxu0 0.0
    %538 = vmatmul.mubr.f32.gmra.mrb[0].mxu0 %v357
    %v539 = vpop.f32.mrb[0].mxu0
    %v540 = vadd.f32 %v396, %v539
    %v541 = vpop.f32.mrb[0].mxu0
    %542 = vmatprep.mubr.f32.mxu0 0.0
    %543 = vmatmul.mubr.f32.gmra.mrb[0].mxu0 %v358
    %v544 = vpop.f32.mrb[0].mxu0
    %v545 = vadd.f32 %v401, %v544
    %v546 = vpop.f32.mrb[0].mxu0
    %547 = vmatprep.mubr.f32.mxu0 0.0
    %548 = vmatmul.mubr.f32.gmra.mrb[0].mxu0 %v359
    %v549 = vpop.f32.mrb[0].mxu0
    %v550 = vadd.f32 %v406, %v549
    %v551 = vpop.f32.mrb[0].mxu0
    %552 = vmatprep.mubr.f32.mxu0 0.0
    %553 = vmatmul.mubr.f32.gmra.mrb[0].mxu0 %v360
    %v554 = vpop.f32.mrb[0].mxu0
    %v555 = vadd.f32 %v411, %v554
    %v556 = vpop.f32.mrb[0].mxu0
    %557 = vmatprep.mubr.f32.mxu0 0.0
    %558 = vmatmul.mubr.f32.gmra.mrb[0].mxu0 %v361
    %v559 = vpop.f32.mrb[0].mxu0
    %v560 = vadd.f32 %v416, %v559
    %v561 = vpop.f32.mrb[0].mxu0
    %562 = vmatprep.mubr.f32.mxu0 0.0
    %563 = vmatmul.mubr.f32.gmra.mrb[0].mxu0 %v362
    %v564 = vpop.f32.mrb[0].mxu0
    %v565 = vadd.f32 %v421, %v564
    %v566 = vpop.f32.mrb[0].mxu0
    %567 = vmatprep.mubr.f32.mxu0 0.0
    %568 = vmatmul.mubr.f32.gmra.mrb[0].mxu0 %v363
    %v569 = vpop.f32.mrb[0].mxu0
    %v570 = vadd.f32 %v426, %v569
    %v571 = vpop.f32.mrb[0].mxu0
    %572 = vmatprep.mubr.f32.mxu0 0.0
    %573 = vmatmul.mubr.f32.gmra.mrb[0].mxu0 %v364
    %v574 = vpop.f32.mrb[0].mxu0
    %v575 = vadd.f32 %v431, %v574
    %v576 = vpop.f32.mrb[0].mxu0
    %577 = vmatprep.mubr.f32.mxu0 0.0
    %578 = vmatmul.mubr.f32.gmra.mrb[0].mxu0 %v365
    %v579 = vpop.f32.mrb[0].mxu0
    %v580 = vadd.f32 %v436, %v579
    %v581 = vpop.f32.mrb[0].mxu0
    %582 = vmatprep.mubr.f32.mxu0 0.0
    %583 = vmatmul.mubr.f32.gmra.mrb[0].mxu0 %v366
    %v584 = vpop.f32.mrb[0].mxu0
    %v585 = vadd.f32 %v441, %v584
    %v586 = vpop.f32.mrb[0].mxu0
    %587 = vmatprep.mubr.f32.mxu0 0.0
    %588 = vmatmul.mubr.f32.gmra.mrb[0].mxu0 %v367
    %v589 = vpop.f32.mrb[0].mxu0
    %v590 = vadd.f32 %v446, %v589
    %v591 = vpop.f32.mrb[0].mxu0
    %592 = vmatprep.mubr.f32.mxu0 0.0
    %593 = vmatmul.mubr.f32.gmra.mrb[0].mxu0 %v368
    %v594 = vpop.f32.mrb[0].mxu0
    %v595 = vadd.f32 %v451, %v594
    %v596 = vpop.f32.mrb[0].mxu0
    %597 = vmatprep.mubr.f32.mxu0 0.0
    %598 = vmatmul.mubr.f32.gmra.mrb[0].mxu0 %v369
    %v599 = vpop.f32.mrb[0].mxu0
    %v600 = vadd.f32 %v456, %v599
    %v601 = vpop.f32.mrb[0].mxu0
    %602 = vmatprep.mubr.f32.mxu0 0.0
    %603 = vmatmul.mubr.f32.gmra.mrb[0].mxu0 %v370
    %v604 = vpop.f32.mrb[0].mxu0
    %v605 = vadd.f32 %v461, %v604
    %v606 = vpop.f32.mrb[0].mxu0
    %607 = vmatprep.mubr.f32.mxu0 0.0
    %608 = vmatmul.mubr.f32.gmra.mrb[0].mxu0 %v371
    %v609 = vpop.f32.mrb[0].mxu0
    %v610 = vadd.f32 %v466, %v609
    %v611 = vpop.f32.mrb[0].mxu0
    %612 = vdwg.mxu0
    %v613 = vmax.f32 %v535, 0.0
    %v614 = vmax.f32 %v540, 0.0
    %v615 = vmax.f32 %v545, 0.0
    %v616 = vmax.f32 %v550, 0.0
    %v617 = vmax.f32 %v555, 0.0
    %v618 = vmax.f32 %v560, 0.0
    %v619 = vmax.f32 %v565, 0.0
    %v620 = vmax.f32 %v570, 0.0
    %v621 = vmax.f32 %v575, 0.0
    %v622 = vmax.f32 %v580, 0.0
    %v623 = vmax.f32 %v585, 0.0
    %v624 = vmax.f32 %v590, 0.0
    %v625 = vmax.f32 %v595, 0.0
    %v626 = vmax.f32 %v600, 0.0
    %v627 = vmax.f32 %v605, 0.0
    %v628 = vmax.f32 %v610, 0.0
    %v629 = vld [vmem:[%s5] sm:$0xff]
    %630 = vmatprep.subr.mxu0 0.0
    %631 = vmatpush1.msra.mxu0 %v613
    %632 = vmatprep.subr.mxu0 0.0
    %633 = vmatpush1.msra.mxu0 %v614
    %634 = vmatprep.subr.mxu0 0.0
    %635 = vmatpush1.msra.mxu0 %v615
    %636 = vmatprep.subr.mxu0 0.0
    %637 = vmatpush1.msra.mxu0 %v616
    %638 = vmatprep.subr.mxu0 0.0
    %639 = vmatpush1.msra.mxu0 %v617
    %640 = vmatprep.subr.mxu0 0.0
    %641 = vmatpush1.msra.mxu0 %v618
    %642 = vmatprep.subr.mxu0 0.0
    %643 = vmatpush1.msra.mxu0 %v619
    %644 = vmatprep.subr.mxu0 0.0
    %645 = vmatpush1.msra.mxu0 %v620
    %646 = vmatprep.subr.mxu0 0.0
    %647 = vmatpush1.msra.mxu0 %v621
    %648 = vmatprep.subr.mxu0 0.0
    %649 = vmatpush1.msra.mxu0 %v622
    %650 = vmatprep.subr.mxu0 0.0
    %651 = vmatpush1.msra.mxu0 %v623
    %652 = vmatprep.subr.mxu0 0.0
    %653 = vmatpush1.msra.mxu0 %v624
    %654 = vmatprep.subr.mxu0 0.0
    %655 = vmatpush1.msra.mxu0 %v625
    %656 = vmatprep.subr.mxu0 0.0
    %657 = vmatpush1.msra.mxu0 %v626
    %658 = vmatprep.subr.mxu0 0.0
    %659 = vmatpush1.msra.mxu0 %v627
    %660 = vmatprep.subr.mxu0 0.0
    %661 = vmatpush1.msra.mxu0 %v628
    %662 = vmatprep.subr.mxu0 0.0
    %663 = vmatpush1.msra.mxu0 0.0
    %664 = vmatprep.subr.mxu0 0.0
    %665 = vmatpush1.msra.mxu0 0.0
    %666 = vmatprep.subr.mxu0 0.0
    %667 = vmatpush1.msra.mxu0 0.0
    %668 = vmatprep.subr.mxu0 0.0
    %669 = vmatpush1.msra.mxu0 0.0
    %670 = vmatprep.subr.mxu0 0.0
    %671 = vmatpush1.msra.mxu0 0.0
    %672 = vmatprep.subr.mxu0 0.0
    %673 = vmatpush1.msra.mxu0 0.0
    %674 = vmatprep.subr.mxu0 0.0
    %675 = vmatpush1.msra.mxu0 0.0
    %676 = vmatprep.subr.mxu0 0.0
    %677 = vmatpush1.msra.mxu0 0.0
    %678 = vmatprep.subr.mxu0 0.0
    %679 = vmatpush1.msra.mxu0 0.0
    %680 = vmatprep.subr.mxu0 0.0
    %681 = vmatpush1.msra.mxu0 0.0
    %682 = vmatprep.subr.mxu0 0.0
    %683 = vmatpush1.msra.mxu0 0.0
    %684 = vmatprep.subr.mxu0 0.0
    %685 = vmatpush1.msra.mxu0 0.0
    %686 = vmatprep.subr.mxu0 0.0
    %687 = vmatpush1.msra.mxu0 0.0
    %688 = vmatprep.subr.mxu0 0.0
    %689 = vmatpush1.msra.mxu0 0.0
    %690 = vmatprep.subr.mxu0 0.0
    %691 = vmatpush1.msra.mxu0 0.0
    %692 = vmatprep.subr.mxu0 0.0
    %693 = vmatpush1.msra.mxu0 0.0
    %694 = vmatprep.mubr.f32.mxu0 0.0
    %695 = vmatmul.mubr.f32.gmra.mrb[0].mxu0 %v629
    %v696 = vpop.f32.mrb[0].mxu0
    %v697 = vadd.f32 0.0, %v696
    %v698 = vpop.f32.mrb[0].mxu0
    %699 = vdwg.mxu0
    %s700 = sld [smem:[#allocation2]]
    %v701 = vstv %s700
    %v702 = vadd.f32 %v697, %v701
    %703 = vst [vmem:[#allocation3] sm:$0x1] %v702
    // Predicated region
    $region30: #{tpu_custom_call.1} parent=1 // pred_check
      _
    $region31: #{tpu_custom_call.1} parent=1 // pred_check_branch
      %705 = sbr.rel (0) target = $region33
    $region32: #{tpu_custom_call.1} parent=1 // pred_region
      %s707 = ssub.s32 16, 16
      %708 = vsyncadd [#allocation4], %s707
      %s710 = sshll.u32 [#allocation3], 4
      %s711 = int_to_ptr.vmem [resolvable:$true] %s710
      %713 = dma.vmem_to_hbm [thread:$0]  %s711, 16, %s7, [#allocation4]
    $region33: #{tpu_custom_call.1} parent=1 // pred_fallthru
      _
    // Predicated region
    $region34: #{tpu_custom_call.1} parent=1 // pred_check
      _
    $region35: #{tpu_custom_call.1} parent=1 // pred_check_branch
      %715 = sbr.rel (0) target = $region37
    $region36: #{tpu_custom_call.1} parent=1 // pred_region
      %716 = dma.done [#allocation4], 16
    $region37: #{tpu_custom_call.1} parent=1 // pred_fallthru
      _
    %717 = vsyncpa [#allocation4], 1

</llo_original>
